<compile_context>
chip_gen: v5e
topology: v5e:2x2
jax: 0.10.0
libtpu: 0.0.40
codegen_flags: <defaults>
</compile_context>

<pallas_src>
import itertools

import numpy as np
import jax
import jax.numpy as jnp
from jax import lax
from jax.experimental import pallas as pl
from jax.experimental.pallas import tpu as pltpu


_LANE = 128
# VMEM budget for the double-buffered pr/t input blocks
# (2 inputs x 2 pipeline buffers) -- comfortably under the default scoped
# VMEM limit on v5e/v6e/v7x.
_INPUT_VMEM_BUDGET = 16 * 1024 * 1024


def _choose_time_tiling(L, S, itemsize):
    """Pick (time_tile, num_tiles, padded_L). Full-L single block whenever it fits."""
    max_tile = _INPUT_VMEM_BUDGET // (4 * S * itemsize)
    max_tile = max(_LANE, (max_tile // _LANE) * _LANE)
    if L <= max_tile:
        tile = L if L % _LANE == 0 else (-(-L // _LANE)) * _LANE
        return tile, 1, tile
    num_tiles = -(-L // max_tile)
    tile = (-(-L // (num_tiles * _LANE))) * _LANE
    return tile, num_tiles, tile * num_tiles


def _make_kernel(S, P, eps, thresh, inactivity_threshold):
    """Build the Pallas kernel body (S sources, P = S! permutations)."""
    # A (S, T) x B (S, T), contracting over the time axis -> A @ B.T : (S, S)
    contract = (((1,), (1,)), ((), ()))

    def kernel(perm_ref, pr_ref, t_ref, out_ref, tt_acc, c_acc, pp_acc):
        # perm_ref : (P, S, S) permutation one-hot masks (kernel input, f32)
        # pr_ref   : (S, T) predictions tile for batch b / time tile k
        # t_ref    : (S, T) targets tile
        # out_ref  : (P, 1) per-batch permutation scores (already * num_active)
        k = pl.program_id(1)

        @pl.when(k == 0)
        def _init():
            tt_acc[...] = jnp.zeros_like(tt_acc)
            c_acc[...] = jnp.zeros_like(c_acc)
            pp_acc[...] = jnp.zeros_like(pp_acc)

        pr = pr_ref[...]
        t = t_ref[...]

        # Gram-style accumulation on the MXU (f32 accumulators):
        #   TT[j,j'] = <t_j, t_j'>,  C[j,i] = <t_j, pr_i>,  PP[i,i'] = <pr_i, pr_i'>
        tt_acc[...] += lax.dot_general(t, t, contract,
                                       preferred_element_type=jnp.float32)
        c_acc[...] += lax.dot_general(t, pr, contract,
                                      preferred_element_type=jnp.float32)
        pp_acc[...] += lax.dot_general(pr, pr, contract,
                                       preferred_element_type=jnp.float32)

        @pl.when(k == pl.num_programs(1) - 1)
        def _finalize():
            TT = tt_acc[...]          # (S, S)
            C = c_acc[...]            # (S, S)
            PP = pp_acc[...]          # (S, S)

            eye = (lax.broadcasted_iota(jnp.int32, (S, S), 0)
                   == lax.broadcasted_iota(jnp.int32, (S, S), 1)
                   ).astype(jnp.float32)

            t_pow = jnp.sum(TT * eye, axis=-1, keepdims=True)      # (S, 1) ||t_j||^2
            pr_pow_row = jnp.sum(PP * eye, axis=0, keepdims=True)  # (1, S) ||pr_i||^2
            # ||sum_j t_j||^2 == sum_{j,j'} <t_j, t_j'>
            mix_pow = jnp.sum(jnp.sum(TT, axis=-1, keepdims=True),
                              axis=0, keepdims=True)               # (1, 1)

            # err[j, i] = ||pr_i - t_j||^2
            err = t_pow + pr_pow_row - 2.0 * C                      # (S, S)

            input_snr = 10.0 * jnp.log10(t_pow / (mix_pow + eps))   # (S, 1)
            mask_f = (input_snr >= inactivity_threshold).astype(jnp.float32)
            denom_stab = thresh * (mask_f * t_pow + (1.0 - mask_f) * mix_pow)
            num_active = jnp.sum(mask_f, axis=0, keepdims=True)     # (1, 1)

            # snr[j, i] = 10 * mask[j] * log10((||t_j||^2+eps) /
            #                                  (err[j,i] + stab_j + eps) + eps)
            snr_mat = 10.0 * mask_f * jnp.log10(
                (t_pow + eps) / (err + denom_stab + eps) + eps)     # (S, S)

            # Vectorized permutation scoring:
            #   scores[p] = sum_j snr_mat[j, perm_p[j]]
            weighted = perm_ref[...] * snr_mat[None, :, :]          # (P, S, S)
            scores = jnp.sum(jnp.sum(weighted, axis=-1),
                             axis=-1, keepdims=True)                # (P, 1)
            out_ref[...] = scores * num_active

    return kernel


def perm_invariant_snr_with_zero_refs(
    pr_batch,
    t_batch,
    *,
    n_sources,
    zero_mean=False,
    backward_loss=True,
    inactivity_threshold=-40.0,
    return_individual_results=False,
    eps=1e-9,
    thresh=1e-3,
    return_best_permutation=False,
):
    """JAX/Pallas equivalent of PermInvariantSNRwithZeroRefs.forward."""
    pr = jnp.asarray(pr_batch)
    t = jnp.asarray(t_batch)
    # bf16 inputs stream half the HBM bytes; MXU accumulates in f32 either way.
    if pr.dtype == jnp.bfloat16 and t.dtype == jnp.bfloat16:
        compute_dtype = jnp.bfloat16
    else:
        compute_dtype = jnp.float32
    pr = pr.astype(compute_dtype)
    t = t.astype(compute_dtype)

    # normalize_input
    min_len = min(pr.shape[-1], t.shape[-1])
    pr = pr[:, :, :min_len]
    t = t[:, :, :min_len]
    if zero_mean:
        # TODO(synk): fold the zero-mean pass into the kernel to avoid an extra
        # HBM round trip when this path is enabled.
        pr = pr - jnp.mean(pr, axis=-1, keepdims=True)
        t = t - jnp.mean(t, axis=-1, keepdims=True)

    B, S, L = pr.shape
    assert S == n_sources

    perms = list(itertools.permutations(range(S)))
    P = len(perms)
    # perm_masks[p, j, i] = 1 iff permutation p matches target j with prediction i
    perm_masks_np = np.zeros((P, S, S), dtype=np.float32)
    for p, perm in enumerate(perms):
        for j, i in enumerate(perm):
            perm_masks_np[p, j, i] = 1.0
    perm_masks = jnp.asarray(perm_masks_np)   # passed as a kernel input

    itemsize = jnp.dtype(compute_dtype).itemsize
    tile, num_tiles, Lp = _choose_time_tiling(L, S, itemsize)
    if Lp != L:
        # Only happens for ragged L (not multiple of 128) or extremely long
        # waveforms; zero padding leaves every inner product unchanged.
        # TODO(synk): mask the ragged tail inside the kernel instead of this pad copy.
        pad = Lp - L
        pr = jnp.pad(pr, ((0, 0), (0, 0), (0, pad)))
        t = jnp.pad(t, ((0, 0), (0, 0), (0, pad)))

    kernel = _make_kernel(S, P, eps, thresh, inactivity_threshold)

    scores = pl.pallas_call(
        kernel,
        out_shape=jax.ShapeDtypeStruct((B, P, 1), jnp.float32),
        grid_spec=pltpu.PrefetchScalarGridSpec(
            num_scalar_prefetch=0,
            grid=(B, num_tiles),
            in_specs=[
                pl.BlockSpec((P, S, S), lambda b, k: (0, 0, 0)),       # perm masks
                pl.BlockSpec((None, S, tile), lambda b, k: (b, 0, k)),  # pr
                pl.BlockSpec((None, S, tile), lambda b, k: (b, 0, k)),  # t
            ],
            out_specs=pl.BlockSpec((None, P, 1), lambda b, k: (b, 0, 0)),
            scratch_shapes=[
                pltpu.VMEM((S, S), jnp.float32),  # TT accumulator
                pltpu.VMEM((S, S), jnp.float32),  # cross-term accumulator
                pltpu.VMEM((S, S), jnp.float32),  # PP accumulator
            ],
        ),
        compiler_params=pltpu.CompilerParams(
            dimension_semantics=("parallel", "arbitrary")
        ),
    )(perm_masks, pr, t)

    scores = scores[:, :, 0]                      # (B, P): all_snrs.sum(-2) * num_active
    best_snr = jnp.max(scores, axis=-1)           # (B,)
    best_perm_ind = jnp.argmax(scores, axis=-1)   # (B,)
    if not return_individual_results:
        best_snr = jnp.mean(best_snr)
    loss = -best_snr if backward_loss else best_snr

    if return_best_permutation:
        perms_tensor = jnp.asarray(np.array(perms, dtype=np.int32))
        return loss, perms_tensor[best_perm_ind]
    return loss


def _reference(pr, t, n_sources, eps=1e-9, thresh=1e-3, inact=-40.0):
    """Plain-JAX reimplementation of the PyTorch forward (for verification)."""
    perms = list(itertools.permutations(range(n_sources)))
    mix = jnp.sum(t, axis=-2, keepdims=True)
    mix_pow = jnp.sum(mix * mix, axis=-1, keepdims=True)
    t_pow = jnp.sum(t * t, axis=-1, keepdims=True)
    input_snr = 10.0 * jnp.log10(t_pow / (mix_pow + eps))
    mask_f = (input_snr >= inact).astype(jnp.float32)
    denom_stab = thresh * (mask_f * t_pow + (1.0 - mask_f) * mix_pow)
    num_active = jnp.sum(mask_f, axis=(-2, -1))[..., None]
    snr_l = []
    for perm in perms:
        ppr = pr[:, list(perm), :]
        err = ppr - t
        denom = jnp.sum(err * err, axis=-1, keepdims=True) + denom_stab + eps
        snr_l.append(10.0 * mask_f * jnp.log10((t_pow + eps) / denom + eps))
    all_snrs = jnp.concatenate(snr_l, axis=-1)
    scores = jnp.sum(all_snrs, axis=-2) * num_active
    return -jnp.mean(jnp.max(scores, axis=-1))


if __name__ == "__main__":
    B, S, L = 2, 3, 400  # batch, n_sources, waveform length
    key = jax.random.PRNGKey(0)
    k1, k2 = jax.random.split(key)
    pr = jax.random.normal(k1, (B, S, L), dtype=jnp.float32)
    t = jax.random.normal(k2, (B, S, L), dtype=jnp.float32)
    # make one reference silent to exercise the zero-reference / inactivity path
    t = t.at[0, 2, :].set(0.0)

    loss = jax.block_until_ready(
        perm_invariant_snr_with_zero_refs(pr, t, n_sources=S))
    ref = jax.block_until_ready(_reference(pr, t, S))
    assert np.allclose(np.asarray(loss), np.asarray(ref), rtol=1e-3, atol=1e-3), (
        loss, ref)

    print("KERNEL_OK")
</pallas_src>

<mosaic_0001>
module attributes {stable_mosaic.version = 11 : i64} {
  func.func @kernel(%arg0: i32, %arg1: i32, %arg2: memref<6x3x3xf32, #tpu.memory_space<vmem>>, %arg3: memref<1x3x512xf32, #tpu.memory_space<vmem>>, %arg4: memref<1x3x512xf32, #tpu.memory_space<vmem>>, %arg5: memref<1x6x1xf32, #tpu.memory_space<vmem>>, %arg6: memref<3x3xf32, #tpu.memory_space<vmem>>, %arg7: memref<3x3xf32, #tpu.memory_space<vmem>>, %arg8: memref<3x3xf32, #tpu.memory_space<vmem>>) attributes {dimension_semantics = [#tpu.dimension_semantics<parallel>, #tpu.dimension_semantics<arbitrary>], iteration_bounds = array<i64: 2, 1>, scalar_prefetch = 0 : i64, scratch_operands = 3 : i64, tpu.core_type = #tpu.core_type<tc>, window_params = [{pipeline_mode = #tpu.pipeline_mode<synchronous>, transform_indices = @transform_0, window_bounds = array<i64: 6, 3, 3>}, {transform_indices = @transform_1, window_bounds = array<i64: 1, 3, 512>}, {transform_indices = @transform_2, window_bounds = array<i64: 1, 3, 512>}, {transform_indices = @transform_3, window_bounds = array<i64: 1, 6, 1>}]} {
    %c0_i32 = arith.constant 0 : i32
    %0 = arith.cmpi eq, %arg1, %c0_i32 : i32
    %1 = arith.extui %0 : i1 to i32
    %c0_i32_0 = arith.constant 0 : i32
    %2 = arith.cmpi ne, %1, %c0_i32_0 : i32
    scf.if %2 {
      %cst_22 = arith.constant 0.000000e+00 : f32
      %22 = vector.broadcast %cst_22 : f32 to vector<3x3xf32>
      %c0_23 = arith.constant 0 : index
      %c0_24 = arith.constant 0 : index
      %23 = vector.load %arg6[%c0_23, %c0_24] : memref<3x3xf32, #tpu.memory_space<vmem>>, vector<3x3xf32>
      tpu.vector_store %arg6[%c0_23, %c0_24], %22 {strides = array<i32>} : memref<3x3xf32, #tpu.memory_space<vmem>>, vector<3x3xf32>,
      %cst_25 = arith.constant 0.000000e+00 : f32
      %24 = vector.broadcast %cst_25 : f32 to vector<3x3xf32>
      %c0_26 = arith.constant 0 : index
      %c0_27 = arith.constant 0 : index
      %25 = vector.load %arg7[%c0_26, %c0_27] : memref<3x3xf32, #tpu.memory_space<vmem>>, vector<3x3xf32>
      tpu.vector_store %arg7[%c0_26, %c0_27], %24 {strides = array<i32>} : memref<3x3xf32, #tpu.memory_space<vmem>>, vector<3x3xf32>,
      %cst_28 = arith.constant 0.000000e+00 : f32
      %26 = vector.broadcast %cst_28 : f32 to vector<3x3xf32>
      %c0_29 = arith.constant 0 : index
      %c0_30 = arith.constant 0 : index
      %27 = vector.load %arg8[%c0_29, %c0_30] : memref<3x3xf32, #tpu.memory_space<vmem>>, vector<3x3xf32>
      tpu.vector_store %arg8[%c0_29, %c0_30], %26 {strides = array<i32>} : memref<3x3xf32, #tpu.memory_space<vmem>>, vector<3x3xf32>,
    } else {
    }
    %c0 = arith.constant 0 : index
    %c0_1 = arith.constant 0 : index
    %c0_2 = arith.constant 0 : index
    %3 = vector.load %arg3[%c0, %c0_1, %c0_2] : memref<1x3x512xf32, #tpu.memory_space<vmem>>, vector<1x3x512xf32>
    %4 = vector.shape_cast %3 : vector<1x3x512xf32> to vector<3x512xf32>
    %c0_3 = arith.constant 0 : index
    %c0_4 = arith.constant 0 : index
    %c0_5 = arith.constant 0 : index
    %5 = vector.load %arg4[%c0_3, %c0_4, %c0_5] : memref<1x3x512xf32, #tpu.memory_space<vmem>>, vector<1x3x512xf32>
    %6 = vector.shape_cast %5 : vector<1x3x512xf32> to vector<3x512xf32>
    %c0_6 = arith.constant 0 : index
    %c0_7 = arith.constant 0 : index
    %7 = vector.load %arg6[%c0_6, %c0_7] : memref<3x3xf32, #tpu.memory_space<vmem>>, vector<3x3xf32>
    %cst = arith.constant dense<0.000000e+00> : vector<3x3xf32>
    %8 = tpu.matmul %6, %6, %cst {dimension_numbers = #tpu.dot_dimension_numbers<[1], [1], [0], [0], [0, 0, 1, 0], [], []>} : vector<3x512xf32>, vector<3x512xf32>, vector<3x3xf32> -> vector<3x3xf32>
    %9 = arith.addf %7, %8 : vector<3x3xf32>
    %c0_8 = arith.constant 0 : index
    %c0_9 = arith.constant 0 : index
    %10 = vector.load %arg6[%c0_8, %c0_9] : memref<3x3xf32, #tpu.memory_space<vmem>>, vector<3x3xf32>
    tpu.vector_store %arg6[%c0_8, %c0_9], %9 {strides = array<i32>} : memref<3x3xf32, #tpu.memory_space<vmem>>, vector<3x3xf32>,
    %c0_10 = arith.constant 0 : index
    %c0_11 = arith.constant 0 : index
    %11 = vector.load %arg7[%c0_10, %c0_11] : memref<3x3xf32, #tpu.memory_space<vmem>>, vector<3x3xf32>
    %cst_12 = arith.constant dense<0.000000e+00> : vector<3x3xf32>
    %12 = tpu.matmul %6, %4, %cst_12 {dimension_numbers = #tpu.dot_dimension_numbers<[1], [1], [0], [0], [0, 0, 1, 0], [], []>} : vector<3x512xf32>, vector<3x512xf32>, vector<3x3xf32> -> vector<3x3xf32>
    %13 = arith.addf %11, %12 : vector<3x3xf32>
    %c0_13 = arith.constant 0 : index
    %c0_14 = arith.constant 0 : index
    %14 = vector.load %arg7[%c0_13, %c0_14] : memref<3x3xf32, #tpu.memory_space<vmem>>, vector<3x3xf32>
    tpu.vector_store %arg7[%c0_13, %c0_14], %13 {strides = array<i32>} : memref<3x3xf32, #tpu.memory_space<vmem>>, vector<3x3xf32>,
    %c0_15 = arith.constant 0 : index
    %c0_16 = arith.constant 0 : index
    %15 = vector.load %arg8[%c0_15, %c0_16] : memref<3x3xf32, #tpu.memory_space<vmem>>, vector<3x3xf32>
    %cst_17 = arith.constant dense<0.000000e+00> : vector<3x3xf32>
    %16 = tpu.matmul %4, %4, %cst_17 {dimension_numbers = #tpu.dot_dimension_numbers<[1], [1], [0], [0], [0, 0, 1, 0], [], []>} : vector<3x512xf32>, vector<3x512xf32>, vector<3x3xf32> -> vector<3x3xf32>
    %17 = arith.addf %15, %16 : vector<3x3xf32>
    %c0_18 = arith.constant 0 : index
    %c0_19 = arith.constant 0 : index
    %18 = vector.load %arg8[%c0_18, %c0_19] : memref<3x3xf32, #tpu.memory_space<vmem>>, vector<3x3xf32>
    tpu.vector_store %arg8[%c0_18, %c0_19], %17 {strides = array<i32>} : memref<3x3xf32, #tpu.memory_space<vmem>>, vector<3x3xf32>,
    %c0_i32_20 = arith.constant 0 : i32
    %19 = arith.cmpi eq, %arg1, %c0_i32_20 : i32
    %20 = arith.extui %19 : i1 to i32
    %c0_i32_21 = arith.constant 0 : i32
    %21 = arith.cmpi ne, %20, %c0_i32_21 : i32
    scf.if %21 {
      %c0_22 = arith.constant 0 : index
      %c0_23 = arith.constant 0 : index
      %22 = vector.load %arg6[%c0_22, %c0_23] : memref<3x3xf32, #tpu.memory_space<vmem>>, vector<3x3xf32>
      %c0_24 = arith.constant 0 : index
      %c0_25 = arith.constant 0 : index
      %23 = vector.load %arg7[%c0_24, %c0_25] : memref<3x3xf32, #tpu.memory_space<vmem>>, vector<3x3xf32>
      %c0_26 = arith.constant 0 : index
      %c0_27 = arith.constant 0 : index
      %24 = vector.load %arg8[%c0_26, %c0_27] : memref<3x3xf32, #tpu.memory_space<vmem>>, vector<3x3xf32>
      %25 = tpu.iota {dimensions = array<i32: 0>} : vector<3x3xi32>
      %26 = tpu.iota {dimensions = array<i32: 1>} : vector<3x3xi32>
      %27 = arith.cmpi eq, %25, %26 : vector<3x3xi32>
      %28 = arith.extui %27 : vector<3x3xi1> to vector<3x3xi32>
      %29 = arith.sitofp %28 : vector<3x3xi32> to vector<3x3xf32>
      %30 = arith.mulf %22, %29 : vector<3x3xf32>
      %cst_28 = arith.constant dense<0.000000e+00> : vector<3xf32>
      %31 = vector.multi_reduction <add>, %30, %cst_28 [1] : vector<3x3xf32> to vector<3xf32>
      %32 = vector.shape_cast %31 : vector<3xf32> to vector<3x1xf32>
      %33 = arith.mulf %24, %29 : vector<3x3xf32>
      %cst_29 = arith.constant dense<0.000000e+00> : vector<3xf32>
      %34 = vector.multi_reduction <add>, %33, %cst_29 [0] : vector<3x3xf32> to vector<3xf32>
      %35 = vector.shape_cast %34 : vector<3xf32> to vector<1x3xf32>
      %cst_30 = arith.constant dense<0.000000e+00> : vector<3xf32>
      %36 = vector.multi_reduction <add>, %22, %cst_30 [1] : vector<3x3xf32> to vector<3xf32>
      %37 = vector.shape_cast %36 : vector<3xf32> to vector<3x1xf32>
      %cst_31 = arith.constant dense<0.000000e+00> : vector<1xf32>
      %38 = vector.multi_reduction <add>, %37, %cst_31 [0] : vector<3x1xf32> to vector<1xf32>
      %39 = vector.shape_cast %38 : vector<1xf32> to vector<1x1xf32>
      %40 = vector.broadcast %32 : vector<3x1xf32> to vector<3x3xf32>
      %41 = vector.broadcast %35 : vector<1x3xf32> to vector<3x3xf32>
      %42 = arith.addf %40, %41 : vector<3x3xf32>
      %cst_32 = arith.constant 2.000000e+00 : f32
      %43 = vector.broadcast %cst_32 : f32 to vector<3x3xf32>
      %44 = arith.mulf %43, %23 : vector<3x3xf32>
      %45 = arith.subf %42, %44 : vector<3x3xf32>
      %cst_33 = arith.constant 9.99999971E-10 : f32
      %46 = vector.broadcast %cst_33 : f32 to vector<1x1xf32>
      %47 = arith.addf %39, %46 : vector<1x1xf32>
      %48 = vector.broadcast %47 : vector<1x1xf32> to vector<3x1xf32>
      %49 = arith.divf %32, %48 : vector<3x1xf32>
      %50 = math.log %49 : vector<3x1xf32>
      %cst_34 = arith.constant 0.434294492 : f32
      %51 = vector.broadcast %cst_34 : f32 to vector<3x1xf32>
      %52 = arith.mulf %50, %51 : vector<3x1xf32>
      %cst_35 = arith.constant 1.000000e+01 : f32
      %53 = vector.broadcast %cst_35 : f32 to vector<3x1xf32>
      %54 = arith.mulf %53, %52 : vector<3x1xf32>
      %cst_36 = arith.constant -4.000000e+01 : f32
      %55 = vector.broadcast %cst_36 : f32 to vector<3x1xf32>
      %56 = arith.cmpf oge, %54, %55 : vector<3x1xf32>
      %57 = arith.extui %56 : vector<3x1xi1> to vector<3x1xi32>
      %58 = arith.sitofp %57 : vector<3x1xi32> to vector<3x1xf32>
      %59 = arith.mulf %58, %32 : vector<3x1xf32>
      %cst_37 = arith.constant 1.000000e+00 : f32
      %60 = vector.broadcast %cst_37 : f32 to vector<3x1xf32>
      %61 = arith.subf %60, %58 : vector<3x1xf32>
      %62 = vector.broadcast %39 : vector<1x1xf32> to vector<3x1xf32>
      %63 = arith.mulf %61, %62 : vector<3x1xf32>
      %64 = arith.addf %59, %63 : vector<3x1xf32>
      %cst_38 = arith.constant 1.000000e-03 : f32
      %65 = vector.broadcast %cst_38 : f32 to vector<3x1xf32>
      %66 = arith.mulf %65, %64 : vector<3x1xf32>
      %cst_39 = arith.constant dense<0.000000e+00> : vector<1xf32>
      %67 = vector.multi_reduction <add>, %58, %cst_39 [0] : vector<3x1xf32> to vector<1xf32>
      %68 = vector.shape_cast %67 : vector<1xf32> to vector<1x1xf32>
      %cst_40 = arith.constant 1.000000e+01 : f32
      %69 = vector.broadcast %cst_40 : f32 to vector<3x1xf32>
      %70 = arith.mulf %69, %58 : vector<3x1xf32>
      %cst_41 = arith.constant 9.99999971E-10 : f32
      %71 = vector.broadcast %cst_41 : f32 to vector<3x1xf32>
      %72 = arith.addf %32, %71 : vector<3x1xf32>
      %73 = vector.broadcast %66 : vector<3x1xf32> to vector<3x3xf32>
      %74 = arith.addf %45, %73 : vector<3x3xf32>
      %cst_42 = arith.constant 9.99999971E-10 : f32
      %75 = vector.broadcast %cst_42 : f32 to vector<3x3xf32>
      %76 = arith.addf %74, %75 : vector<3x3xf32>
      %77 = vector.broadcast %72 : vector<3x1xf32> to vector<3x3xf32>
      %78 = arith.divf %77, %76 : vector<3x3xf32>
      %cst_43 = arith.constant 9.99999971E-10 : f32
      %79 = vector.broadcast %cst_43 : f32 to vector<3x3xf32>
      %80 = arith.addf %78, %79 : vector<3x3xf32>
      %81 = math.log %80 : vector<3x3xf32>
      %cst_44 = arith.constant 0.434294492 : f32
      %82 = vector.broadcast %cst_44 : f32 to vector<3x3xf32>
      %83 = arith.mulf %81, %82 : vector<3x3xf32>
      %84 = vector.broadcast %70 : vector<3x1xf32> to vector<3x3xf32>
      %85 = arith.mulf %84, %83 : vector<3x3xf32>
      %c0_45 = arith.constant 0 : index
      %c0_46 = arith.constant 0 : index
      %c0_47 = arith.constant 0 : index
      %86 = vector.load %arg2[%c0_45, %c0_46, %c0_47] : memref<6x3x3xf32, #tpu.memory_space<vmem>>, vector<6x3x3xf32>
      %87 = vector.shape_cast %85 : vector<3x3xf32> to vector<1x3x3xf32>
      %88 = vector.broadcast %87 : vector<1x3x3xf32> to vector<6x3x3xf32>
      %89 = arith.mulf %86, %88 : vector<6x3x3xf32>
      %cst_48 = arith.constant dense<0.000000e+00> : vector<6x3xf32>
      %90 = vector.multi_reduction <add>, %89, %cst_48 [2] : vector<6x3x3xf32> to vector<6x3xf32>
      %cst_49 = arith.constant dense<0.000000e+00> : vector<6xf32>
      %91 = vector.multi_reduction <add>, %90, %cst_49 [1] : vector<6x3xf32> to vector<6xf32>
      %92 = vector.shape_cast %91 : vector<6xf32> to vector<6x1xf32>
      %93 = vector.broadcast %68 : vector<1x1xf32> to vector<6x1xf32>
      %94 = arith.mulf %92, %93 : vector<6x1xf32>
      %c0_50 = arith.constant 0 : index
      %c0_51 = arith.constant 0 : index
      %c0_52 = arith.constant 0 : index
      %95 = vector.load %arg5[%c0_50, %c0_51, %c0_52] : memref<1x6x1xf32, #tpu.memory_space<vmem>>, vector<1x6x1xf32>
      %96 = vector.shape_cast %95 : vector<1x6x1xf32> to vector<6x1xf32>
      %97 = vector.shape_cast %94 : vector<6x1xf32> to vector<1x6x1xf32>
      tpu.vector_store %arg5[%c0_50, %c0_51, %c0_52], %97 {strides = array<i32>} : memref<1x6x1xf32, #tpu.memory_space<vmem>>, vector<1x6x1xf32>,
    } else {
    }
    return
  }
  func.func @transform_0(%arg0: i32, %arg1: i32) -> (i32, i32, i32) {
    %c0_i32 = arith.constant 0 : i32
    %c0_i32_0 = arith.constant 0 : i32
    %c0_i32_1 = arith.constant 0 : i32
    %c0_i32_2 = arith.constant 0 : i32
    return %c0_i32, %c0_i32_0, %c0_i32_1 : i32, i32, i32
  }
  func.func @transform_1(%arg0: i32, %arg1: i32) -> (i32, i32, i32) {
    %c0_i32 = arith.constant 0 : i32
    %c0_i32_0 = arith.constant 0 : i32
    return %arg0, %c0_i32, %arg1 : i32, i32, i32
  }
  func.func @transform_2(%arg0: i32, %arg1: i32) -> (i32, i32, i32) {
    %c0_i32 = arith.constant 0 : i32
    %c0_i32_0 = arith.constant 0 : i32
    return %arg0, %c0_i32, %arg1 : i32, i32, i32
  }
  func.func @transform_3(%arg0: i32, %arg1: i32) -> (i32, i32, i32) {
    %c0_i32 = arith.constant 0 : i32
    %c0_i32_0 = arith.constant 0 : i32
    %c0_i32_1 = arith.constant 0 : i32
    return %arg0, %c0_i32, %c0_i32_0 : i32, i32, i32
  }
}

</mosaic_0001>

<llo_original>
// kernel: tpu_custom_call.1
$region0: #{tpu_custom_call.1}
  #allocation0 [shape = 'u32[]', space=smem, size = 0x4, offset = 0x4, fixed_abs, tag = 'smem constant byte address 0x4 - core index']
  #allocation1 [shape = 'u32[72,128]{1,0:T(1,128)}', space=vmem, size = 0x9000, scoped, tag = 'internal scratch']
  #allocation2 [shape = 'f32[3,3]{1,0:T(4,128)}', space=vmem, size = 0x800, scoped, tag = 'scratch operand']
  #allocation3 [shape = 'f32[3,3]{1,0:T(4,128)}', space=vmem, size = 0x800, scoped, tag = 'scratch operand']
  #allocation4 [shape = 'f32[3,3]{1,0:T(4,128)}', space=vmem, size = 0x800, scoped, tag = 'scratch operand']
  %s0 = inlined_call_operand.vmem [shape: f32[6,3,3], index: 0, kind: input, shape index: {}]
  %s1 = inlined_call_operand.vmem [shape: f32[2,3,512], index: 1, kind: input, shape index: {}]
  %s2 = inlined_call_operand.vmem [shape: f32[2,3,512], index: 2, kind: input, shape index: {}]
  %s3 = inlined_call_operand.vmem [shape: f32[2,6,1], index: 3, kind: output, shape index: {}]
  %s4 = sld [smem:[#allocation0]]
  $region53: #{tpu_custom_call.1} parent=0
    _
  %s6 = ssub.s32 1, %s4
  %s7 = scalar_select 0, %s6, %s4
  loop: start=0, step=1, limit=4
  $region2: #{tpu_custom_call.1} parent=0 // loop_pre_header
    _
  $region3: #{tpu_custom_call.1} parent=0 // loop_header
    %s9 = sphi 0, %s13
    %p10 = scmp.ge.s32.totalorder %s9, 4
    %s16 = sphi 0, %s28
    %s17 = sphi 0, %s24
    %s18 = sphi 0, %s16
    %s19 = sphi 0, %s17
    %s20 = sphi 0, %s18
    %s21 = sphi 0, %s19
    %s29 = sphi 0, %s29
    %s31 = sphi 0, %s29
    %s32 = sphi 0, %s31
    %s46 = sphi 0, %s32
    %s54 = sphi 0, %s56
    %s57 = sphi 0, %s54
    %s58 = sphi 0, %s57
    %s74 = sphi 0, %s58
    %s82 = sphi 0, %s84
    %s85 = sphi 0, %s82
    %s86 = sphi 0, %s85
    %s102 = sphi 0, %s86
    %s108 = sphi 0, %s110
    %s111 = sphi 0, %s108
    %s112 = sphi 0, %s111
    %s128 = sphi 0, %s112
  $region4: #{tpu_custom_call.1} parent=0 // loop_header_branch
    %12 = sbr.rel (%p10) target = $region8
  $region5: #{tpu_custom_call.1} parent=0 // loop_body
    %s14 = ssub.s32 %s9, 1
    %s15 = ssub.s32 %s9, 2
    %s22 = sadd.s32 1, %s17
    %p23 = scmp.ge.s32.totalorder %s22, 1
    %s24 = scalar_select %p23, 0, %s22
    %s25 = sadd.s32 1, %s16
    %s26 = scalar_select %p23, %s25, %s16
    %p27 = scmp.ge.s32.totalorder %s26, 2
    %s28 = scalar_select %p27, 0, %s26
    %s30 = sadd.s32 %s29, 1
    %p33 = scmp.eq.s32.totalorder %s9, 1
    %p34 = scmp.ne.s32.totalorder %s29, %s31
    %p35 = scmp.eq.s32.totalorder %s9, 0
    %p36 = por %p34, %p35
    %p37 = scmp.ne.s32.totalorder %s29, %s31
    %p38 = scmp.eq.s32.totalorder %s14, 1
    %p39 = por %p37, %p38
    %p40 = scmp.ne.s32.totalorder %s31, %s32
    %p41 = scmp.eq.s32.totalorder %s14, 0
    %p42 = por %p40, %p41
    %p43 = scmp.ne.s32.totalorder %s31, %s32
    %p44 = scmp.eq.s32.totalorder %s15, 1
    %p45 = por %p43, %p44
    %p47 = scmp.ne.s32.totalorder %s32, %s46
    %p48 = scmp.eq.s32.totalorder %s15, 0
    %p49 = por %p47, %p48
    %s50 = ssub.s32 %s16, %s28
    %s51 = ssub.s32 %s17, %s24
    %s52 = sor.u32 %s50, %s51
    %p53 = scmp.eq.s32.totalorder %s52, 0
    %s55 = sadd.s32 %s54, 1
    %s56 = scalar_select %p53, %s54, %s55
    %p59 = pneg %p53
    %p60 = scmp.eq.s32.totalorder %s9, 1
    %p61 = por %p59, %p60
    %p62 = scmp.ne.s32.totalorder %s54, %s57
    %p63 = scmp.eq.s32.totalorder %s9, 0
    %p64 = por %p62, %p63
    %p65 = scmp.ne.s32.totalorder %s54, %s57
    %p66 = scmp.eq.s32.totalorder %s14, 1
    %p67 = por %p65, %p66
    %p68 = scmp.ne.s32.totalorder %s57, %s58
    %p69 = scmp.eq.s32.totalorder %s14, 0
    %p70 = por %p68, %p69
    %p71 = scmp.ne.s32.totalorder %s57, %s58
    %p72 = scmp.eq.s32.totalorder %s15, 1
    %p73 = por %p71, %p72
    %p75 = scmp.ne.s32.totalorder %s58, %s74
    %p76 = scmp.eq.s32.totalorder %s15, 0
    %p77 = por %p75, %p76
    %s78 = ssub.s32 %s16, %s28
    %s79 = ssub.s32 %s17, %s24
    %s80 = sor.u32 %s78, %s79
    %p81 = scmp.eq.s32.totalorder %s80, 0
    %s83 = sadd.s32 %s82, 1
    %s84 = scalar_select %p81, %s82, %s83
    %p87 = pneg %p81
    %p88 = scmp.eq.s32.totalorder %s9, 1
    %p89 = por %p87, %p88
    %p90 = scmp.ne.s32.totalorder %s82, %s85
    %p91 = scmp.eq.s32.totalorder %s9, 0
    %p92 = por %p90, %p91
    %p93 = scmp.ne.s32.totalorder %s82, %s85
    %p94 = scmp.eq.s32.totalorder %s14, 1
    %p95 = por %p93, %p94
    %p96 = scmp.ne.s32.totalorder %s85, %s86
    %p97 = scmp.eq.s32.totalorder %s14, 0
    %p98 = por %p96, %p97
    %p99 = scmp.ne.s32.totalorder %s85, %s86
    %p100 = scmp.eq.s32.totalorder %s15, 1
    %p101 = por %p99, %p100
    %p103 = scmp.ne.s32.totalorder %s86, %s102
    %p104 = scmp.eq.s32.totalorder %s15, 0
    %p105 = por %p103, %p104
    %s106 = ssub.s32 %s16, %s28
    %p107 = scmp.eq.s32.totalorder %s106, 0
    %s109 = sadd.s32 %s108, 1
    %s110 = scalar_select %p107, %s108, %s109
    %p113 = pneg %p107
    %p114 = scmp.eq.s32.totalorder %s9, 1
    %p115 = por %p113, %p114
    %p116 = scmp.ne.s32.totalorder %s108, %s111
    %p117 = scmp.eq.s32.totalorder %s9, 0
    %p118 = por %p116, %p117
    %p119 = scmp.ne.s32.totalorder %s108, %s111
    %p120 = scmp.eq.s32.totalorder %s14, 1
    %p121 = por %p119, %p120
    %p122 = scmp.ne.s32.totalorder %s111, %s112
    %p123 = scmp.eq.s32.totalorder %s14, 0
    %p124 = por %p122, %p123
    %p125 = scmp.ne.s32.totalorder %s111, %s112
    %p126 = scmp.eq.s32.totalorder %s15, 1
    %p127 = por %p125, %p126
    %p129 = scmp.ne.s32.totalorder %s112, %s128
    %p130 = scmp.eq.s32.totalorder %s15, 0
    %p131 = por %p129, %p130
    %p132 = scmp.le.s32.totalorder 1, %s9
    %p133 = scmp.lt.s32.totalorder %s9, 3
    %p134 = pnand %p132, %p133
    %p135 = pneg %p134
    // Predicated region
    $region9: #{tpu_custom_call.1} parent=5 // pred_check
      _
    $region10: #{tpu_custom_call.1} parent=5 // pred_check_branch
      %137 = sbr.rel (%p134) target = $region12
    $region11: #{tpu_custom_call.1} parent=5 // pred_region
      %s138 = ssub.s32 %s9, 1
      // Predicated region
      $region13: #{tpu_custom_call.1} parent=11 // pred_check
        %p139 = pneg %p42
      $region14: #{tpu_custom_call.1} parent=11 // pred_check_branch
        %141 = sbr.rel (%p139) target = $region16
      $region15: #{tpu_custom_call.1} parent=11 // pred_region
        _
      $region16: #{tpu_custom_call.1} parent=11 // pred_fallthru
        _
    $region12: #{tpu_custom_call.1} parent=5 // pred_fallthru
      _
    %p142 = scmp.lt.s32.totalorder %s9, 2
    // Predicated region
    $region17: #{tpu_custom_call.1} parent=5 // pred_check
      %p143 = pneg %p142
    $region18: #{tpu_custom_call.1} parent=5 // pred_check_branch
      %145 = sbr.rel (%p143) target = $region20
    $region19: #{tpu_custom_call.1} parent=5 // pred_region
      // Predicated region
      $region21: #{tpu_custom_call.1} parent=19 // pred_check
        %p146 = pneg %p64
      $region22: #{tpu_custom_call.1} parent=19 // pred_check_branch
        %148 = sbr.rel (%p146) target = $region24
      $region23: #{tpu_custom_call.1} parent=19 // pred_region
        %s149 = smul.u32 4, %s17
        %p150 = scmp.lt.s32.totalorder %s16, 1
        %s151 = scalar_select %p150, %s16, 1
        %p152 = scmp.lt.s32.totalorder %s149, 3
        %s153 = scalar_select %p152, %s149, 3
        %s154 = smul.addr %s151, 4
        %s155 = sadd.s32 %s153, %s154
        %s156 = smul.addr %s155, 4
        %s157 = scalar_lea.vmem %s1, %s156
        %s158 = smul.u32 4, %s17
      $region24: #{tpu_custom_call.1} parent=19 // pred_fallthru
        _
      // Predicated region
      $region25: #{tpu_custom_call.1} parent=19 // pred_check
        %p159 = pneg %p92
      $region26: #{tpu_custom_call.1} parent=19 // pred_check_branch
        %161 = sbr.rel (%p159) target = $region28
      $region27: #{tpu_custom_call.1} parent=19 // pred_region
        %s162 = smul.u32 4, %s17
        %p163 = scmp.lt.s32.totalorder %s16, 1
        %s164 = scalar_select %p163, %s16, 1
        %p165 = scmp.lt.s32.totalorder %s162, 3
        %s166 = scalar_select %p165, %s162, 3
        %s167 = smul.addr %s164, 4
        %s168 = sadd.s32 %s166, %s167
        %s169 = smul.addr %s168, 4
        %s170 = scalar_lea.vmem %s2, %s169
        %s171 = smul.u32 4, %s17
      $region28: #{tpu_custom_call.1} parent=19 // pred_fallthru
        _
    $region20: #{tpu_custom_call.1} parent=5 // pred_fallthru
      _
    %p172 = scmp.le.s32.totalorder 1, %s9
    %p173 = scmp.lt.s32.totalorder %s9, 3
    %p174 = pnand %p172, %p173
    %p175 = pneg %p174
    // Predicated region
    $region29: #{tpu_custom_call.1} parent=5 // pred_check
      _
    $region30: #{tpu_custom_call.1} parent=5 // pred_check_branch
      %177 = sbr.rel (%p174) target = $region32
    $region31: #{tpu_custom_call.1} parent=5 // pred_region
      %s178 = ssub.s32 %s9, 1
      %p179 = pneg %p42
      %p180 = pneg %p39
      %s181 = smul.u32 4, %s19
      %p182 = scmp.lt.s32.totalorder %s18, 1
      %s183 = scalar_select %p182, %s18, 1
      %p184 = scmp.lt.s32.totalorder %s181, 3
      %s185 = scalar_select %p184, %s181, 3
      %s186 = smul.addr %s183, 4
      %s187 = sadd.s32 %s185, %s186
      %s188 = smul.addr %s187, 4
      %s189 = scalar_lea.vmem %s1, %s188
      %p190 = pneg %p70
      %p191 = pneg %p67
      %s192 = smul.u32 4, %s19
      %p193 = scmp.lt.s32.totalorder %s18, 1
      %s194 = scalar_select %p193, %s18, 1
      %p195 = scmp.lt.s32.totalorder %s192, 3
      %s196 = scalar_select %p195, %s192, 3
      %s197 = smul.addr %s194, 4
      %s198 = sadd.s32 %s196, %s197
      %s199 = smul.addr %s198, 4
      %s200 = scalar_lea.vmem %s2, %s199
      %p201 = pneg %p98
      %p202 = pneg %p95
      %p203 = pneg %p124
      %p204 = pneg %p121
      %p205 = scmp.lt.s32.totalorder %s18, 1
      %s206 = scalar_select %p205, %s18, 1
      %s207 = smul.addr %s206, 8
      %s208 = scalar_lea.vmem %s3, %s207
      %s209 = smul.u32 4, %s19
      %p210 = scmp.lt.s32.totalorder %s18, 1
      %s211 = scalar_select %p210, %s18, 1
      %p212 = scmp.lt.s32.totalorder %s209, 3
      %s213 = scalar_select %p212, %s209, 3
      %s214 = smul.addr %s211, 4
      %s215 = sadd.s32 %s213, %s214
      %s216 = smul.addr %s215, 4
      %s217 = scalar_lea.vmem %s1, %s216
      %s218 = smul.u32 4, %s19
      %s219 = smul.u32 4, %s19
      %p220 = scmp.lt.s32.totalorder %s18, 1
      %s221 = scalar_select %p220, %s18, 1
      %p222 = scmp.lt.s32.totalorder %s219, 3
      %s223 = scalar_select %p222, %s219, 3
      %s224 = smul.addr %s221, 4
      %s225 = sadd.s32 %s223, %s224
      %s226 = smul.addr %s225, 4
      %s227 = scalar_lea.vmem %s2, %s226
      %s228 = smul.u32 4, %s19
      %p229 = scmp.lt.s32.totalorder %s18, 1
      %s230 = scalar_select %p229, %s18, 1
      %s231 = smul.addr %s230, 8
      %s232 = scalar_lea.vmem %s3, %s231
      %p233 = scmp.eq.s32.totalorder %s19, 0
      // Predicated region
      $region33: #{tpu_custom_call.1} parent=31 // pred_check
        %p234 = pneg %p233
      $region34: #{tpu_custom_call.1} parent=31 // pred_check_branch
        %236 = sbr.rel (%p234) target = $region36
      $region35: #{tpu_custom_call.1} parent=31 // pred_region
        %vm237 = vcmask 18432
        %238 = vst.msk [vmem:[#allocation2] sm:$0x7] %vm237, 0.0
        %239 = vst.msk [vmem:[#allocation3] sm:$0x7] %vm237, 0.0
        %240 = vst.msk [vmem:[#allocation4] sm:$0x7] %vm237, 0.0
      $region36: #{tpu_custom_call.1} parent=31 // pred_fallthru
        _
      %v241 = vld [vmem:[%s217] sm:$0x77]
      %v242 = vld [vmem:[%s217 + $0x8] sm:$0x77]
      %v243 = vld [vmem:[%s227] sm:$0x77]
      %v244 = vld [vmem:[%s227 + $0x8] sm:$0x77]
      %v245 = vld [vmem:[#allocation2] sm:$0x7]
      %248 = vst [vmem:[#allocation1] ss:$2 sm:$0xff] %v243
      %s249 = scalar_lea.vmem [#allocation1], 16
      %250 = vst [vmem:[%s249] ss:$2 sm:$0xff] %v244
      %v251 = vld.sshfl [vmem:[#allocation1] sm:$0xff pattern:$0x75316420]
      %v252 = vld.sshfl [vmem:[#allocation1 + $0x8] sm:$0xff pattern:$0x75316420]
      %v253 = vld.sshfl [vmem:[#allocation1 + $0x10] sm:$0xff pattern:$0x75316420]
      %v254 = vld.sshfl [vmem:[#allocation1 + $0x18] sm:$0xff pattern:$0x75316420]
      %259 = vst [vmem:[#allocation1] ss:$2 sm:$0xff] %v243
      %s260 = scalar_lea.vmem [#allocation1], 16
      %261 = vst [vmem:[%s260] ss:$2 sm:$0xff] %v244
      %v262 = vld.sshfl [vmem:[#allocation1] sm:$0xff pattern:$0x75316420]
      %v263 = vld.sshfl [vmem:[#allocation1 + $0x8] sm:$0xff pattern:$0x75316420]
      %v264 = vld.sshfl [vmem:[#allocation1 + $0x10] sm:$0xff pattern:$0x75316420]
      %v265 = vld.sshfl [vmem:[#allocation1 + $0x18] sm:$0xff pattern:$0x75316420]
      %270 = vmatpush.xpose.msra.mxu0 0.0
      %271 = vmatpush.xpose.msra.mxu0 0.0
      %272 = vmatpush.xpose.msra.mxu0 0.0
      %273 = vmatpush.xpose.msra.mxu0 0.0
      %274 = vmatpush.xpose.msra.mxu0 0.0
      %275 = vmatpush.xpose.msra.mxu0 0.0
      %276 = vmatpush.xpose.msra.mxu0 0.0
      %277 = vmatpush.xpose.msra.mxu0 0.0
      %278 = vmatpush.xpose.msra.mxu0 0.0
      %279 = vmatpush.xpose.msra.mxu0 0.0
      %280 = vmatpush.xpose.msra.mxu0 0.0
      %281 = vmatpush.xpose.msra.mxu0 0.0
      %282 = vmatpush.xpose.msra.mxu0 0.0
      %283 = vmatpush.xpose.msra.mxu0 0.0
      %284 = vmatpush.xpose.msra.mxu0 0.0
      %285 = vmatpush.xpose.msra.mxu0 %v262
      %286 = vmatmul.f32.gmra.mxu0 %v251
      %v287 = vpop.f32.mrf.mxu0
      %v288 = vadd.f32 0.0, %v287
      %289 = vdwg.mxu0
      %290 = vmatpush.xpose.msra.mxu0 0.0
      %291 = vmatpush.xpose.msra.mxu0 0.0
      %292 = vmatpush.xpose.msra.mxu0 0.0
      %293 = vmatpush.xpose.msra.mxu0 0.0
      %294 = vmatpush.xpose.msra.mxu0 0.0
      %295 = vmatpush.xpose.msra.mxu0 0.0
      %296 = vmatpush.xpose.msra.mxu0 0.0
      %297 = vmatpush.xpose.msra.mxu0 0.0
      %298 = vmatpush.xpose.msra.mxu0 0.0
      %299 = vmatpush.xpose.msra.mxu0 0.0
      %300 = vmatpush.xpose.msra.mxu0 0.0
      %301 = vmatpush.xpose.msra.mxu0 0.0
      %302 = vmatpush.xpose.msra.mxu0 0.0
      %303 = vmatpush.xpose.msra.mxu0 0.0
      %304 = vmatpush.xpose.msra.mxu0 0.0
      %305 = vmatpush.xpose.msra.mxu0 %v263
      %306 = vmatmul.f32.gmra.mxu0 %v252
      %v307 = vpop.f32.mrf.mxu0
      %v308 = vadd.f32 %v288, %v307
      %309 = vdwg.mxu0
      %310 = vmatpush.xpose.msra.mxu0 0.0
      %311 = vmatpush.xpose.msra.mxu0 0.0
      %312 = vmatpush.xpose.msra.mxu0 0.0
      %313 = vmatpush.xpose.msra.mxu0 0.0
      %314 = vmatpush.xpose.msra.mxu0 0.0
      %315 = vmatpush.xpose.msra.mxu0 0.0
      %316 = vmatpush.xpose.msra.mxu0 0.0
      %317 = vmatpush.xpose.msra.mxu0 0.0
      %318 = vmatpush.xpose.msra.mxu0 0.0
      %319 = vmatpush.xpose.msra.mxu0 0.0
      %320 = vmatpush.xpose.msra.mxu0 0.0
      %321 = vmatpush.xpose.msra.mxu0 0.0
      %322 = vmatpush.xpose.msra.mxu0 0.0
      %323 = vmatpush.xpose.msra.mxu0 0.0
      %324 = vmatpush.xpose.msra.mxu0 0.0
      %325 = vmatpush.xpose.msra.mxu0 %v264
      %326 = vmatmul.f32.gmra.mxu0 %v253
      %v327 = vpop.f32.mrf.mxu0
      %v328 = vadd.f32 %v308, %v327
      %329 = vdwg.mxu0
      %330 = vmatpush.xpose.msra.mxu0 0.0
      %331 = vmatpush.xpose.msra.mxu0 0.0
      %332 = vmatpush.xpose.msra.mxu0 0.0
      %333 = vmatpush.xpose.msra.mxu0 0.0
      %334 = vmatpush.xpose.msra.mxu0 0.0
      %335 = vmatpush.xpose.msra.mxu0 0.0
      %336 = vmatpush.xpose.msra.mxu0 0.0
      %337 = vmatpush.xpose.msra.mxu0 0.0
      %338 = vmatpush.xpose.msra.mxu0 0.0
      %339 = vmatpush.xpose.msra.mxu0 0.0
      %340 = vmatpush.xpose.msra.mxu0 0.0
      %341 = vmatpush.xpose.msra.mxu0 0.0
      %342 = vmatpush.xpose.msra.mxu0 0.0
      %343 = vmatpush.xpose.msra.mxu0 0.0
      %344 = vmatpush.xpose.msra.mxu0 0.0
      %345 = vmatpush.xpose.msra.mxu0 %v265
      %346 = vmatmul.f32.gmra.mxu0 %v254
      %v347 = vpop.f32.mrf.mxu0
      %v348 = vadd.f32 %v328, %v347
      %349 = vdwg.mxu0
      %v350 = vadd.f32 %v245, %v348
      %vm351 = vcmask 18432
      %352 = vst.msk [vmem:[#allocation2] sm:$0x7] %vm351, %v350
      %v353 = vld [vmem:[#allocation3] sm:$0x7]
      %354 = vst [vmem:[#allocation1] ss:$2 sm:$0xff] %v243
      %s355 = scalar_lea.vmem [#allocation1], 16
      %356 = vst [vmem:[%s355] ss:$2 sm:$0xff] %v244
      %v357 = vld.sshfl [vmem:[#allocation1] sm:$0xff pattern:$0x75316420]
      %v358 = vld.sshfl [vmem:[#allocation1 + $0x8] sm:$0xff pattern:$0x75316420]
      %v359 = vld.sshfl [vmem:[#allocation1 + $0x10] sm:$0xff pattern:$0x75316420]
      %v360 = vld.sshfl [vmem:[#allocation1 + $0x18] sm:$0xff pattern:$0x75316420]
      %367 = vst [vmem:[#allocation1] ss:$2 sm:$0xff] %v241
      %s368 = scalar_lea.vmem [#allocation1], 16
      %369 = vst [vmem:[%s368] ss:$2 sm:$0xff] %v242
      %v370 = vld.sshfl [vmem:[#allocation1] sm:$0xff pattern:$0x75316420]
      %v371 = vld.sshfl [vmem:[#allocation1 + $0x8] sm:$0xff pattern:$0x75316420]
      %v372 = vld.sshfl [vmem:[#allocation1 + $0x10] sm:$0xff pattern:$0x75316420]
      %v373 = vld.sshfl [vmem:[#allocation1 + $0x18] sm:$0xff pattern:$0x75316420]
      %378 = vmatpush.xpose.msra.mxu0 0.0
      %379 = vmatpush.xpose.msra.mxu0 0.0
      %380 = vmatpush.xpose.msra.mxu0 0.0
      %381 = vmatpush.xpose.msra.mxu0 0.0
      %382 = vmatpush.xpose.msra.mxu0 0.0
      %383 = vmatpush.xpose.msra.mxu0 0.0
      %384 = vmatpush.xpose.msra.mxu0 0.0
      %385 = vmatpush.xpose.msra.mxu0 0.0
      %386 = vmatpush.xpose.msra.mxu0 0.0
      %387 = vmatpush.xpose.msra.mxu0 0.0
      %388 = vmatpush.xpose.msra.mxu0 0.0
      %389 = vmatpush.xpose.msra.mxu0 0.0
      %390 = vmatpush.xpose.msra.mxu0 0.0
      %391 = vmatpush.xpose.msra.mxu0 0.0
      %392 = vmatpush.xpose.msra.mxu0 0.0
      %393 = vmatpush.xpose.msra.mxu0 %v370
      %394 = vmatmul.f32.gmra.mxu0 %v357
      %v395 = vpop.f32.mrf.mxu0
      %v396 = vadd.f32 0.0, %v395
      %397 = vdwg.mxu0
      %398 = vmatpush.xpose.msra.mxu0 0.0
      %399 = vmatpush.xpose.msra.mxu0 0.0
      %400 = vmatpush.xpose.msra.mxu0 0.0
      %401 = vmatpush.xpose.msra.mxu0 0.0
      %402 = vmatpush.xpose.msra.mxu0 0.0
      %403 = vmatpush.xpose.msra.mxu0 0.0
      %404 = vmatpush.xpose.msra.mxu0 0.0
      %405 = vmatpush.xpose.msra.mxu0 0.0
      %406 = vmatpush.xpose.msra.mxu0 0.0
      %407 = vmatpush.xpose.msra.mxu0 0.0
      %408 = vmatpush.xpose.msra.mxu0 0.0
      %409 = vmatpush.xpose.msra.mxu0 0.0
      %410 = vmatpush.xpose.msra.mxu0 0.0
      %411 = vmatpush.xpose.msra.mxu0 0.0
      %412 = vmatpush.xpose.msra.mxu0 0.0
      %413 = vmatpush.xpose.msra.mxu0 %v371
      %414 = vmatmul.f32.gmra.mxu0 %v358
      %v415 = vpop.f32.mrf.mxu0
      %v416 = vadd.f32 %v396, %v415
      %417 = vdwg.mxu0
      %418 = vmatpush.xpose.msra.mxu0 0.0
      %419 = vmatpush.xpose.msra.mxu0 0.0
      %420 = vmatpush.xpose.msra.mxu0 0.0
      %421 = vmatpush.xpose.msra.mxu0 0.0
      %422 = vmatpush.xpose.msra.mxu0 0.0
      %423 = vmatpush.xpose.msra.mxu0 0.0
      %424 = vmatpush.xpose.msra.mxu0 0.0
      %425 = vmatpush.xpose.msra.mxu0 0.0
      %426 = vmatpush.xpose.msra.mxu0 0.0
      %427 = vmatpush.xpose.msra.mxu0 0.0
      %428 = vmatpush.xpose.msra.mxu0 0.0
      %429 = vmatpush.xpose.msra.mxu0 0.0
      %430 = vmatpush.xpose.msra.mxu0 0.0
      %431 = vmatpush.xpose.msra.mxu0 0.0
      %432 = vmatpush.xpose.msra.mxu0 0.0
      %433 = vmatpush.xpose.msra.mxu0 %v372
      %434 = vmatmul.f32.gmra.mxu0 %v359
      %v435 = vpop.f32.mrf.mxu0
      %v436 = vadd.f32 %v416, %v435
      %437 = vdwg.mxu0
      %438 = vmatpush.xpose.msra.mxu0 0.0
      %439 = vmatpush.xpose.msra.mxu0 0.0
      %440 = vmatpush.xpose.msra.mxu0 0.0
      %441 = vmatpush.xpose.msra.mxu0 0.0
      %442 = vmatpush.xpose.msra.mxu0 0.0
      %443 = vmatpush.xpose.msra.mxu0 0.0
      %444 = vmatpush.xpose.msra.mxu0 0.0
      %445 = vmatpush.xpose.msra.mxu0 0.0
      %446 = vmatpush.xpose.msra.mxu0 0.0
      %447 = vmatpush.xpose.msra.mxu0 0.0
      %448 = vmatpush.xpose.msra.mxu0 0.0
      %449 = vmatpush.xpose.msra.mxu0 0.0
      %450 = vmatpush.xpose.msra.mxu0 0.0
      %451 = vmatpush.xpose.msra.mxu0 0.0
      %452 = vmatpush.xpose.msra.mxu0 0.0
      %453 = vmatpush.xpose.msra.mxu0 %v373
      %454 = vmatmul.f32.gmra.mxu0 %v360
      %v455 = vpop.f32.mrf.mxu0
      %v456 = vadd.f32 %v436, %v455
      %457 = vdwg.mxu0
      %v458 = vadd.f32 %v353, %v456
      %459 = vst.msk [vmem:[#allocation3] sm:$0x7] %vm351, %v458
      %v460 = vld [vmem:[#allocation4] sm:$0x7]
      %461 = vst [vmem:[#allocation1] ss:$2 sm:$0xff] %v241
      %s462 = scalar_lea.vmem [#allocation1], 16
      %463 = vst [vmem:[%s462] ss:$2 sm:$0xff] %v242
      %v464 = vld.sshfl [vmem:[#allocation1] sm:$0xff pattern:$0x75316420]
      %v465 = vld.sshfl [vmem:[#allocation1 + $0x8] sm:$0xff pattern:$0x75316420]
      %v466 = vld.sshfl [vmem:[#allocation1 + $0x10] sm:$0xff pattern:$0x75316420]
      %v467 = vld.sshfl [vmem:[#allocation1 + $0x18] sm:$0xff pattern:$0x75316420]
      %472 = vst [vmem:[#allocation1] ss:$2 sm:$0xff] %v241
      %s473 = scalar_lea.vmem [#allocation1], 16
      %474 = vst [vmem:[%s473] ss:$2 sm:$0xff] %v242
      %v475 = vld.sshfl [vmem:[#allocation1] sm:$0xff pattern:$0x75316420]
      %v476 = vld.sshfl [vmem:[#allocation1 + $0x8] sm:$0xff pattern:$0x75316420]
      %v477 = vld.sshfl [vmem:[#allocation1 + $0x10] sm:$0xff pattern:$0x75316420]
      %v478 = vld.sshfl [vmem:[#allocation1 + $0x18] sm:$0xff pattern:$0x75316420]
      %483 = vmatpush.xpose.msra.mxu0 0.0
      %484 = vmatpush.xpose.msra.mxu0 0.0
      %485 = vmatpush.xpose.msra.mxu0 0.0
      %486 = vmatpush.xpose.msra.mxu0 0.0
      %487 = vmatpush.xpose.msra.mxu0 0.0
      %488 = vmatpush.xpose.msra.mxu0 0.0
      %489 = vmatpush.xpose.msra.mxu0 0.0
      %490 = vmatpush.xpose.msra.mxu0 0.0
      %491 = vmatpush.xpose.msra.mxu0 0.0
      %492 = vmatpush.xpose.msra.mxu0 0.0
      %493 = vmatpush.xpose.msra.mxu0 0.0
      %494 = vmatpush.xpose.msra.mxu0 0.0
      %495 = vmatpush.xpose.msra.mxu0 0.0
      %496 = vmatpush.xpose.msra.mxu0 0.0
      %497 = vmatpush.xpose.msra.mxu0 0.0
      %498 = vmatpush.xpose.msra.mxu0 %v475
      %499 = vmatmul.f32.gmra.mxu0 %v464
      %v500 = vpop.f32.mrf.mxu0
      %v501 = vadd.f32 0.0, %v500
      %502 = vdwg.mxu0
      %503 = vmatpush.xpose.msra.mxu0 0.0
      %504 = vmatpush.xpose.msra.mxu0 0.0
      %505 = vmatpush.xpose.msra.mxu0 0.0
      %506 = vmatpush.xpose.msra.mxu0 0.0
      %507 = vmatpush.xpose.msra.mxu0 0.0
      %508 = vmatpush.xpose.msra.mxu0 0.0
      %509 = vmatpush.xpose.msra.mxu0 0.0
      %510 = vmatpush.xpose.msra.mxu0 0.0
      %511 = vmatpush.xpose.msra.mxu0 0.0
      %512 = vmatpush.xpose.msra.mxu0 0.0
      %513 = vmatpush.xpose.msra.mxu0 0.0
      %514 = vmatpush.xpose.msra.mxu0 0.0
      %515 = vmatpush.xpose.msra.mxu0 0.0
      %516 = vmatpush.xpose.msra.mxu0 0.0
      %517 = vmatpush.xpose.msra.mxu0 0.0
      %518 = vmatpush.xpose.msra.mxu0 %v476
      %519 = vmatmul.f32.gmra.mxu0 %v465
      %v520 = vpop.f32.mrf.mxu0
      %v521 = vadd.f32 %v501, %v520
      %522 = vdwg.mxu0
      %523 = vmatpush.xpose.msra.mxu0 0.0
      %524 = vmatpush.xpose.msra.mxu0 0.0
      %525 = vmatpush.xpose.msra.mxu0 0.0
      %526 = vmatpush.xpose.msra.mxu0 0.0
      %527 = vmatpush.xpose.msra.mxu0 0.0
      %528 = vmatpush.xpose.msra.mxu0 0.0
      %529 = vmatpush.xpose.msra.mxu0 0.0
      %530 = vmatpush.xpose.msra.mxu0 0.0
      %531 = vmatpush.xpose.msra.mxu0 0.0
      %532 = vmatpush.xpose.msra.mxu0 0.0
      %533 = vmatpush.xpose.msra.mxu0 0.0
      %534 = vmatpush.xpose.msra.mxu0 0.0
      %535 = vmatpush.xpose.msra.mxu0 0.0
      %536 = vmatpush.xpose.msra.mxu0 0.0
      %537 = vmatpush.xpose.msra.mxu0 0.0
      %538 = vmatpush.xpose.msra.mxu0 %v477
      %539 = vmatmul.f32.gmra.mxu0 %v466
      %v540 = vpop.f32.mrf.mxu0
      %v541 = vadd.f32 %v521, %v540
      %542 = vdwg.mxu0
      %543 = vmatpush.xpose.msra.mxu0 0.0
      %544 = vmatpush.xpose.msra.mxu0 0.0
      %545 = vmatpush.xpose.msra.mxu0 0.0
      %546 = vmatpush.xpose.msra.mxu0 0.0
      %547 = vmatpush.xpose.msra.mxu0 0.0
      %548 = vmatpush.xpose.msra.mxu0 0.0
      %549 = vmatpush.xpose.msra.mxu0 0.0
      %550 = vmatpush.xpose.msra.mxu0 0.0
      %551 = vmatpush.xpose.msra.mxu0 0.0
      %552 = vmatpush.xpose.msra.mxu0 0.0
      %553 = vmatpush.xpose.msra.mxu0 0.0
      %554 = vmatpush.xpose.msra.mxu0 0.0
      %555 = vmatpush.xpose.msra.mxu0 0.0
      %556 = vmatpush.xpose.msra.mxu0 0.0
      %557 = vmatpush.xpose.msra.mxu0 0.0
      %558 = vmatpush.xpose.msra.mxu0 %v478
      %559 = vmatmul.f32.gmra.mxu0 %v467
      %v560 = vpop.f32.mrf.mxu0
      %v561 = vadd.f32 %v541, %v560
      %562 = vdwg.mxu0
      %v563 = vadd.f32 %v460, %v561
      %564 = vst.msk [vmem:[#allocation4] sm:$0x7] %vm351, %v563
      // Predicated region
      $region37: #{tpu_custom_call.1} parent=31 // pred_check
        %p565 = pneg %p233
      $region38: #{tpu_custom_call.1} parent=31 // pred_check_branch
        %567 = sbr.rel (%p565) target = $region40
      $region39: #{tpu_custom_call.1} parent=31 // pred_region
        %v568 = vld [vmem:[#allocation2] sm:$0x7]
        %v569 = vld [vmem:[#allocation3] sm:$0x7]
        %v570 = vld [vmem:[#allocation4] sm:$0x7]
        %v571 = vlaneseq
        %v572 = vshrl.u32 %v571, 7
        %v573 = vlaneseq
        %v574 = vand.u32 %v573, 127
        %vm575 = vcmp.eq.s32.totalorder %v572, %v574
        %v576 = vsel %vm575, 1, 0
        %v577 = vcvt.s32.f32 %v576
        %v578 = vmul.f32 %v568, %v577
        %v579 = vsel %vm351, %v578, 0.0
        %580 = vadd.xlane.f32.xlu0 %v579
        %v581 = vpop.xlane.xlu0 %580
        %v582 = vmul.f32 %v570, %v577
        %v583 = vsel %vm351, %v582, 0.0
        %v584 = vrot.slane %v583, 4
        %v585 = vadd.f32 %v583, %v584
        %v586 = vrot.slane %v585, 2
        %v587 = vadd.f32 %v585, %v586
        %v588 = vrot.slane %v587, 1
        %v589 = vadd.f32 %v587, %v588
        %v590 = vsel %vm351, %v568, 0.0
        %591 = vadd.xlane.f32.xlu0 %v590
        %v592 = vpop.xlane.xlu0 %591
        %vm593 = vcmask 1042432
        %v594 = vsel %vm593, %v592, 0.0
        %v595 = vrot.slane %v594, 4
        %v596 = vadd.f32 %v594, %v595
        %v597 = vrot.slane %v596, 2
        %v598 = vadd.f32 %v596, %v597
        %v599 = vrot.slane %v598, 1
        %v600 = vadd.f32 %v598, %v599
        %v601 = vadd.f32 %v581, %v589
        %v602 = vmul.f32 %v569, 2.0
        %v603 = vsub.f32 %v601, %v602
        %v604 = vadd.f32 %v600, 1e-09
        %v605 = vrcp.pop %v604
        %v606 = vmul.f32 %v604, %v605
        %v607 = vsub.f32 1.0, %v606
        %v608 = vmul.f32 %v605, %v607
        %v609 = vadd.f32 %v605, %v608
        %vm610 = vweird.f32 %v604
        %vm611 = vweird.f32 %v605
        %vm612 = vmor %vm610, %vm611
        %v613 = vsel %vm612, %v605, %v609
        %v614 = vand.u32 2147483647, %v604
        %vm615 = vcmp.eq.f32.partialorder %v614, 8.507059e+37
        %v616 = vand.u32 %v604, 2147483648
        %v617 = vor.u32 1.1754944e-38, %v616
        %v618 = vsel %vm615, %v617, %v613
        %v619 = vmul.f32 %v581, %v618
        %v620 = vlog2.pop %v619
        %v621 = vmul.f32 %v620, 0.6931472
        %v622 = vmul.f32 %v621, 0.4342945
        %v623 = vmul.f32 %v622, 10.0
        %vm624 = vcmp.ge.f32.partialorder %v623, -40.0
        %v625 = vsel %vm624, 1, 0
        %v626 = vcvt.s32.f32 %v625
        %v627 = vmul.f32 %v626, %v581
        %v628 = vsub.f32 1.0, %v626
        %v629 = vmul.f32 %v628, %v600
        %v630 = vadd.f32 %v627, %v629
        %v631 = vmul.f32 %v630, 0.001
        %v632 = vsel %vm593, %v626, 0.0
        %v633 = vrot.slane %v632, 4
        %v634 = vadd.f32 %v632, %v633
        %v635 = vrot.slane %v634, 2
        %v636 = vadd.f32 %v634, %v635
        %v637 = vrot.slane %v636, 1
        %v638 = vadd.f32 %v636, %v637
        %v639 = vmul.f32 %v626, 10.0
        %v640 = vadd.f32 %v581, 1e-09
        %v641 = vadd.f32 %v603, %v631
        %v642 = vadd.f32 %v641, 1e-09
        %v643 = vrcp.pop %v642
        %v644 = vmul.f32 %v642, %v643
        %v645 = vsub.f32 1.0, %v644
        %v646 = vmul.f32 %v643, %v645
        %v647 = vadd.f32 %v643, %v646
        %vm648 = vweird.f32 %v642
        %vm649 = vweird.f32 %v643
        %vm650 = vmor %vm648, %vm649
        %v651 = vsel %vm650, %v643, %v647
        %v652 = vand.u32 2147483647, %v642
        %vm653 = vcmp.eq.f32.partialorder %v652, 8.507059e+37
        %v654 = vand.u32 %v642, 2147483648
        %v655 = vor.u32 1.1754944e-38, %v654
        %v656 = vsel %vm653, %v655, %v651
        %v657 = vmul.f32 %v640, %v656
        %v658 = vadd.f32 %v657, 1e-09
        %v659 = vlog2.pop %v658
        %v660 = vmul.f32 %v659, 0.6931472
        %v661 = vmul.f32 %v660, 0.4342945
        %v662 = vmul.f32 %v639, %v661
        %v663 = vld [vmem:[%s0] sm:$0x7]
        %v664 = vld [vmem:[%s0 + $0x4] sm:$0x7]
        %v665 = vld [vmem:[%s0 + $0x8] sm:$0x7]
        %v666 = vld [vmem:[%s0 + $0xc] sm:$0x7]
        %v667 = vld [vmem:[%s0 + $0x10] sm:$0x7]
        %v668 = vld [vmem:[%s0 + $0x14] sm:$0x7]
        %v669 = vmul.f32 %v663, %v662
        %v670 = vmul.f32 %v664, %v662
        %v671 = vmul.f32 %v665, %v662
        %v672 = vmul.f32 %v666, %v662
        %v673 = vmul.f32 %v667, %v662
        %v674 = vmul.f32 %v668, %v662
        %v675 = vsel %vm351, %v669, 0.0
        %676 = vadd.xlane.f32.xlu0 %v675
        %v677 = vpop.xlane.xlu0 %676
        %v678 = vsel %vm351, %v670, 0.0
        %679 = vadd.xlane.f32.xlu0 %v678
        %v680 = vpop.xlane.xlu0 %679
        %v681 = vsel %vm351, %v671, 0.0
        %682 = vadd.xlane.f32.xlu0 %v681
        %v683 = vpop.xlane.xlu0 %682
        %v684 = vsel %vm351, %v672, 0.0
        %685 = vadd.xlane.f32.xlu0 %v684
        %v686 = vpop.xlane.xlu0 %685
        %v687 = vsel %vm351, %v673, 0.0
        %688 = vadd.xlane.f32.xlu0 %v687
        %v689 = vpop.xlane.xlu0 %688
        %v690 = vsel %vm351, %v674, 0.0
        %691 = vadd.xlane.f32.xlu0 %v690
        %v692 = vpop.xlane.xlu0 %691
        %v699 = vperm.slane %v677, %v574
        %v700 = vperm.slane %v680, %v574
        %v701 = vperm.slane %v683, %v574
        %v702 = vperm.slane %v686, %v574
        %v703 = vperm.slane %v689, %v574
        %v704 = vperm.slane %v692, %v574
        %vm705 = vcmask 1041409
        %v706 = vsel %vm705, %v700, %v699
        %vm707 = vcmask 1042434
        %v708 = vsel %vm707, %v701, %v706
        %vm709 = vcmask 1043459
        %v710 = vsel %vm709, %v702, %v708
        %vm711 = vcmask 1044484
        %v712 = vsel %vm711, %v703, %v710
        %vm713 = vcmask 1045509
        %v714 = vsel %vm713, %v704, %v712
        %vm716 = vcmask 21504
        %v717 = vsel %vm716, %v714, 0.0
        %718 = vadd.xlane.f32.xlu0 %v717
        %v719 = vpop.xlane.xlu0 %718
        %v720 = vmul.f32 %v719, %v638
        %vm721 = vcmask 5120
        %722 = vst.msk [vmem:[%s232] sm:$0x3f] %vm721, %v720
      $region40: #{tpu_custom_call.1} parent=31 // pred_fallthru
        _
      %p723 = scmp.lt.s32.totalorder %s18, 1
      %s724 = scalar_select %p723, %s18, 1
      %s725 = smul.addr %s724, 8
      %s726 = scalar_lea.vmem %s3, %s725
      // Predicated region
      $region41: #{tpu_custom_call.1} parent=31 // pred_check
        %p727 = pneg %p121
      $region42: #{tpu_custom_call.1} parent=31 // pred_check_branch
        %729 = sbr.rel (%p727) target = $region44
      $region43: #{tpu_custom_call.1} parent=31 // pred_region
        _
      $region44: #{tpu_custom_call.1} parent=31 // pred_fallthru
        _
    $region32: #{tpu_custom_call.1} parent=5 // pred_fallthru
      _
    %p730 = scmp.le.s32.totalorder 2, %s9
    // Predicated region
    $region45: #{tpu_custom_call.1} parent=5 // pred_check
      %p731 = pneg %p730
    $region46: #{tpu_custom_call.1} parent=5 // pred_check_branch
      %733 = sbr.rel (%p731) target = $region48
    $region47: #{tpu_custom_call.1} parent=5 // pred_region
      %s734 = ssub.s32 %s9, 2
      // Predicated region
      $region49: #{tpu_custom_call.1} parent=47 // pred_check
        %p735 = pneg %p127
      $region50: #{tpu_custom_call.1} parent=47 // pred_check_branch
        %737 = sbr.rel (%p735) target = $region52
      $region51: #{tpu_custom_call.1} parent=47 // pred_region
        %p738 = scmp.lt.s32.totalorder %s20, 1
        %s739 = scalar_select %p738, %s20, 1
        %s740 = smul.addr %s739, 8
        %s741 = scalar_lea.vmem %s3, %s740
      $region52: #{tpu_custom_call.1} parent=47 // pred_fallthru
        _
    $region48: #{tpu_custom_call.1} parent=5 // pred_fallthru
      _
  $region6: #{tpu_custom_call.1} parent=0 // loop_footer
    %s13 = sadd.s32 1, %s9
  $region7: #{tpu_custom_call.1} parent=0 // loop_footer_branch
    %8 = sbr.rel target = $region3
  $region8: #{tpu_custom_call.1} parent=0 // loop_exit
    _

</llo_original>
